<compile_context>
chip_gen: v7x
topology: tpu7x:2x2x1
jax: 0.10.0
libtpu: 0.0.40
codegen_flags: <defaults>
</compile_context>

<pallas_src>
import jax
import jax.numpy as jnp
from jax.experimental import pallas as pl
from jax.experimental.pallas import tpu as pltpu


def _outconv_kernel(x_ref, w_ref, b_ref, o_ref):
    # x_ref: (nb, C_in, SUB, tl)  VMEM
    # w_ref: (C_out, C_in)        SMEM (scalars)
    # b_ref: (C_out,)             SMEM (scalars)
    # o_ref: (nb, C_out, SUB, tl) VMEM
    c_out, c_in = w_ref.shape
    for oc in range(c_out):                      # small static constant -> unrolled
        # Per-channel ref views are zero-cost; each load streams one channel slab,
        # keeping only one input slab + one accumulator live at a time.
        acc = w_ref[oc, 0] * x_ref[:, 0]         # (nb, SUB, tl), f32
        for ic in range(1, c_in):                # unrolled VPU scalar-broadcast MACs
            acc = acc + w_ref[oc, ic] * x_ref[:, ic]
        # Per-channel store: no concat temporary, accumulator freed immediately.
        o_ref[:, oc] = (acc + b_ref[oc]).astype(o_ref.dtype)


def outconv_pallas(x_nchw, weight, bias, *, max_lane_tile=None,
                   vmem_tile_budget_bytes=5 << 20):
    """1x1 conv (PyTorch Conv2d kernel_size=1) forward.

    x_nchw: (N, C_in, H, W) float32
    weight: (C_out, C_in, 1, 1) float32  (PyTorch Conv2d weight layout)
    bias:   (C_out,) float32
    returns (N, C_out, H, W) float32
    """
    N, C_in, H, W = x_nchw.shape
    C_out = weight.shape[0]
    HW = H * W
    itemsize = jnp.dtype(x_nchw.dtype).itemsize

    # Pixels packed across sublanes AND lanes. Row-major reshape is free:
    # pixel p = s * lanes + l; output uses the same mapping so it's consistent.
    SUB = 8 if HW % 8 == 0 else 1                # SUB=1 fallback for odd spatial sizes
    lanes = HW // SUB

    x4 = x_nchw.reshape(N, C_in, SUB, lanes)
    w_mat = weight.reshape(C_out, C_in)
    b_vec = bias.reshape(C_out)

    # ---- tile sizing -------------------------------------------------------
    # One grid step holds an (nb, C_in, SUB, tl) x-block plus its matching
    # (nb, C_out, SUB, tl) y-block, double-buffered by the pipeline.  Budget
    # the single-buffered pair against `vmem_tile_budget_bytes` (default 5 MiB
    # -> ~10 MiB double-buffered, under even v5e's 16 MiB default scoped VMEM),
    # counting sublane padding (SUB=1 pads to 8) and lane padding (to 128).
    padded_sub = 8
    bytes_per_lane_col = (C_in + C_out) * padded_sub * itemsize
    lane_budget = max(128, (vmem_tile_budget_bytes // bytes_per_lane_col) // 128 * 128)
    lane_target = min(16384, lane_budget)        # 16384 lanes * SUB=8 ~= 128K px/step
    if max_lane_tile is not None:
        lane_target = max(128, min(lane_target, max_lane_tile))

    # Lane tile: full extent (always legal) or a multiple of 128 (lane-dense).
    tl = lanes if lanes <= lane_target else lane_target

    # Batch several images per grid step when the per-image block is small, so
    # each step still moves ~MBs of HBM traffic (amortizes per-step overhead).
    nb = min(N, max(1, lane_target // tl))

    # Keep >= 2 grid steps on a parallel axis when possible (v7x has 2 TCs).
    if pl.cdiv(N, nb) * pl.cdiv(lanes, tl) < 2:
        if N > 1:
            nb = max(1, N // 2)
        elif tl > 256:
            tl = pl.cdiv(pl.cdiv(lanes, 2), 128) * 128

    grid = (pl.cdiv(N, nb), pl.cdiv(lanes, tl))

    # Explicit VMEM limit with headroom (review: don't rely on the comment-math;
    # account for padding + double buffering).  Capped at 32 MiB: <= the default
    # scoped VMEM on v6e/v7x and safely below v5e/v6e/v7x physical capacity.
    padded_tl = pl.cdiv(tl, 128) * 128
    block_bytes = nb * (C_in + C_out) * padded_sub * padded_tl * itemsize
    vmem_limit = min(32 << 20, max(16 << 20, 4 * block_bytes + (4 << 20)))

    cost = pl.CostEstimate(
        flops=2 * N * HW * C_in * C_out,
        transcendentals=0,
        bytes_accessed=N * HW * (C_in + C_out) * itemsize
        + w_mat.size * jnp.dtype(w_mat.dtype).itemsize
        + b_vec.size * jnp.dtype(b_vec.dtype).itemsize,
    )

    out4 = pl.pallas_call(
        _outconv_kernel,
        out_shape=jax.ShapeDtypeStruct((N, C_out, SUB, lanes), x_nchw.dtype),
        grid_spec=pltpu.PrefetchScalarGridSpec(
            num_scalar_prefetch=0,
            grid=grid,
            in_specs=[
                # Pixels dense in (sublane, lane); channels + batch in leading dims.
                pl.BlockSpec((nb, C_in, SUB, tl), lambda n, p: (n, 0, 0, p)),
                # Tiny weight / bias: whole arrays in SMEM, read as scalars.
                pl.BlockSpec(memory_space=pltpu.MemorySpace.SMEM),
                pl.BlockSpec(memory_space=pltpu.MemorySpace.SMEM),
            ],
            out_specs=pl.BlockSpec((nb, C_out, SUB, tl), lambda n, p: (n, 0, 0, p)),
        ),
        compiler_params=pltpu.CompilerParams(
            dimension_semantics=("parallel", "parallel"),
            vmem_limit_bytes=vmem_limit,
        ),
        cost_estimate=cost,
    )(x4, w_mat, b_vec)

    return out4.reshape(N, C_out, H, W)


if __name__ == "__main__":
    key = jax.random.PRNGKey(0)
    k_x, k_w, k_b = jax.random.split(key, 3)

    # Small shapes consistent with OutConv(in_channels=4, out_channels=3)
    N, C_in, H, W = 2, 4, 16, 16
    C_out = 3

    x = jax.random.normal(k_x, (N, C_in, H, W), dtype=jnp.float32)
    weight = jax.random.normal(k_w, (C_out, C_in, 1, 1), dtype=jnp.float32) * 0.1
    bias = jax.random.normal(k_b, (C_out,), dtype=jnp.float32) * 0.1

    def ref_fn(xa, wa, ba):
        co, ci = wa.shape[0], wa.shape[1]
        return (jnp.einsum("nchw,oc->nohw", xa, wa.reshape(co, ci))
                + ba.reshape(1, co, 1, 1))

    # Main case: single full-extent lane block per image, batched over N.
    out = jax.block_until_ready(outconv_pallas(x, weight, bias))
    assert out.shape == (N, C_out, H, W)
    assert jnp.allclose(out, ref_fn(x, weight, bias), atol=1e-5, rtol=1e-5)

    # Ragged lane tile: lanes=200 with tl forced to 128 -> masked last block.
    x2 = jax.random.normal(k_x, (3, C_in, 40, 40), dtype=jnp.float32)
    out2 = jax.block_until_ready(outconv_pallas(x2, weight, bias, max_lane_tile=128))
    assert jnp.allclose(out2, ref_fn(x2, weight, bias), atol=1e-5, rtol=1e-5)

    # Odd spatial size (HW % 8 != 0) -> SUB=1 fallback path.
    x3 = jax.random.normal(k_w, (2, C_in, 15, 15), dtype=jnp.float32)
    out3 = jax.block_until_ready(outconv_pallas(x3, weight, bias))
    assert jnp.allclose(out3, ref_fn(x3, weight, bias), atol=1e-5, rtol=1e-5)

    print("KERNEL_OK")
</pallas_src>

<mosaic_0001>
module attributes {stable_mosaic.version = 11 : i64} {
  func.func @_outconv_kernel(%arg0: i32, %arg1: i32, %arg2: memref<1x4x8x32xf32, #tpu.memory_space<vmem>>, %arg3: memref<3x4xf32, #tpu.memory_space<smem>>, %arg4: memref<3xf32, #tpu.memory_space<smem>>, %arg5: memref<1x3x8x32xf32, #tpu.memory_space<vmem>>) attributes {dimension_semantics = [#tpu.dimension_semantics<parallel>, #tpu.dimension_semantics<parallel>], iteration_bounds = array<i64: 2, 1>, scalar_prefetch = 0 : i64, scratch_operands = 0 : i64, tpu.core_type = #tpu.core_type<tc>, window_params = [{transform_indices = @transform_0, window_bounds = array<i64: 1, 4, 8, 32>}, {transform_indices = @transform_1, window_bounds = array<i64: 3, 4>}, {transform_indices = @transform_2, window_bounds = array<i64: 3>}, {transform_indices = @transform_3, window_bounds = array<i64: 1, 3, 8, 32>}]} {
    %c0 = arith.constant 0 : index
    %c0_0 = arith.constant 0 : index
    %0 = memref.load %arg3[%c0, %c0_0] : memref<3x4xf32, #tpu.memory_space<smem>>
    %c0_1 = arith.constant 0 : index
    %c0_2 = arith.constant 0 : index
    %c0_3 = arith.constant 0 : index
    %c0_4 = arith.constant 0 : index
    %1 = vector.load %arg2[%c0_1, %c0_2, %c0_3, %c0_4] : memref<1x4x8x32xf32, #tpu.memory_space<vmem>>, vector<1x1x8x32xf32>
    %2 = vector.shape_cast %1 : vector<1x1x8x32xf32> to vector<1x8x32xf32>
    %3 = vector.broadcast %0 : f32 to vector<1x8x32xf32>
    %4 = arith.mulf %3, %2 : vector<1x8x32xf32>
    %c0_5 = arith.constant 0 : index
    %c1 = arith.constant 1 : index
    %5 = memref.load %arg3[%c0_5, %c1] : memref<3x4xf32, #tpu.memory_space<smem>>
    %c0_6 = arith.constant 0 : index
    %c1_7 = arith.constant 1 : index
    %c0_8 = arith.constant 0 : index
    %c0_9 = arith.constant 0 : index
    %6 = vector.load %arg2[%c0_6, %c1_7, %c0_8, %c0_9] : memref<1x4x8x32xf32, #tpu.memory_space<vmem>>, vector<1x1x8x32xf32>
    %7 = vector.shape_cast %6 : vector<1x1x8x32xf32> to vector<1x8x32xf32>
    %8 = vector.broadcast %5 : f32 to vector<1x8x32xf32>
    %9 = arith.mulf %8, %7 : vector<1x8x32xf32>
    %10 = arith.addf %4, %9 : vector<1x8x32xf32>
    %c0_10 = arith.constant 0 : index
    %c2 = arith.constant 2 : index
    %11 = memref.load %arg3[%c0_10, %c2] : memref<3x4xf32, #tpu.memory_space<smem>>
    %c0_11 = arith.constant 0 : index
    %c2_12 = arith.constant 2 : index
    %c0_13 = arith.constant 0 : index
    %c0_14 = arith.constant 0 : index
    %12 = vector.load %arg2[%c0_11, %c2_12, %c0_13, %c0_14] : memref<1x4x8x32xf32, #tpu.memory_space<vmem>>, vector<1x1x8x32xf32>
    %13 = vector.shape_cast %12 : vector<1x1x8x32xf32> to vector<1x8x32xf32>
    %14 = vector.broadcast %11 : f32 to vector<1x8x32xf32>
    %15 = arith.mulf %14, %13 : vector<1x8x32xf32>
    %16 = arith.addf %10, %15 : vector<1x8x32xf32>
    %c0_15 = arith.constant 0 : index
    %c3 = arith.constant 3 : index
    %17 = memref.load %arg3[%c0_15, %c3] : memref<3x4xf32, #tpu.memory_space<smem>>
    %c0_16 = arith.constant 0 : index
    %c3_17 = arith.constant 3 : index
    %c0_18 = arith.constant 0 : index
    %c0_19 = arith.constant 0 : index
    %18 = vector.load %arg2[%c0_16, %c3_17, %c0_18, %c0_19] : memref<1x4x8x32xf32, #tpu.memory_space<vmem>>, vector<1x1x8x32xf32>
    %19 = vector.shape_cast %18 : vector<1x1x8x32xf32> to vector<1x8x32xf32>
    %20 = vector.broadcast %17 : f32 to vector<1x8x32xf32>
    %21 = arith.mulf %20, %19 : vector<1x8x32xf32>
    %22 = arith.addf %16, %21 : vector<1x8x32xf32>
    %c0_20 = arith.constant 0 : index
    %23 = memref.load %arg4[%c0_20] : memref<3xf32, #tpu.memory_space<smem>>
    %24 = vector.broadcast %23 : f32 to vector<1x8x32xf32>
    %25 = arith.addf %22, %24 : vector<1x8x32xf32>
    %c0_21 = arith.constant 0 : index
    %c0_22 = arith.constant 0 : index
    %c0_23 = arith.constant 0 : index
    %c0_24 = arith.constant 0 : index
    %26 = vector.load %arg5[%c0_21, %c0_22, %c0_23, %c0_24] : memref<1x3x8x32xf32, #tpu.memory_space<vmem>>, vector<1x1x8x32xf32>
    %27 = vector.shape_cast %26 : vector<1x1x8x32xf32> to vector<1x8x32xf32>
    %28 = vector.shape_cast %25 : vector<1x8x32xf32> to vector<1x1x8x32xf32>
    tpu.vector_store %arg5[%c0_21, %c0_22, %c0_23, %c0_24], %28 {strides = array<i32>} : memref<1x3x8x32xf32, #tpu.memory_space<vmem>>, vector<1x1x8x32xf32>,
    %c1_25 = arith.constant 1 : index
    %c0_26 = arith.constant 0 : index
    %29 = memref.load %arg3[%c1_25, %c0_26] : memref<3x4xf32, #tpu.memory_space<smem>>
    %c0_27 = arith.constant 0 : index
    %c0_28 = arith.constant 0 : index
    %c0_29 = arith.constant 0 : index
    %c0_30 = arith.constant 0 : index
    %30 = vector.load %arg2[%c0_27, %c0_28, %c0_29, %c0_30] : memref<1x4x8x32xf32, #tpu.memory_space<vmem>>, vector<1x1x8x32xf32>
    %31 = vector.shape_cast %30 : vector<1x1x8x32xf32> to vector<1x8x32xf32>
    %32 = vector.broadcast %29 : f32 to vector<1x8x32xf32>
    %33 = arith.mulf %32, %31 : vector<1x8x32xf32>
    %c1_31 = arith.constant 1 : index
    %c1_32 = arith.constant 1 : index
    %34 = memref.load %arg3[%c1_31, %c1_32] : memref<3x4xf32, #tpu.memory_space<smem>>
    %c0_33 = arith.constant 0 : index
    %c1_34 = arith.constant 1 : index
    %c0_35 = arith.constant 0 : index
    %c0_36 = arith.constant 0 : index
    %35 = vector.load %arg2[%c0_33, %c1_34, %c0_35, %c0_36] : memref<1x4x8x32xf32, #tpu.memory_space<vmem>>, vector<1x1x8x32xf32>
    %36 = vector.shape_cast %35 : vector<1x1x8x32xf32> to vector<1x8x32xf32>
    %37 = vector.broadcast %34 : f32 to vector<1x8x32xf32>
    %38 = arith.mulf %37, %36 : vector<1x8x32xf32>
    %39 = arith.addf %33, %38 : vector<1x8x32xf32>
    %c1_37 = arith.constant 1 : index
    %c2_38 = arith.constant 2 : index
    %40 = memref.load %arg3[%c1_37, %c2_38] : memref<3x4xf32, #tpu.memory_space<smem>>
    %c0_39 = arith.constant 0 : index
    %c2_40 = arith.constant 2 : index
    %c0_41 = arith.constant 0 : index
    %c0_42 = arith.constant 0 : index
    %41 = vector.load %arg2[%c0_39, %c2_40, %c0_41, %c0_42] : memref<1x4x8x32xf32, #tpu.memory_space<vmem>>, vector<1x1x8x32xf32>
    %42 = vector.shape_cast %41 : vector<1x1x8x32xf32> to vector<1x8x32xf32>
    %43 = vector.broadcast %40 : f32 to vector<1x8x32xf32>
    %44 = arith.mulf %43, %42 : vector<1x8x32xf32>
    %45 = arith.addf %39, %44 : vector<1x8x32xf32>
    %c1_43 = arith.constant 1 : index
    %c3_44 = arith.constant 3 : index
    %46 = memref.load %arg3[%c1_43, %c3_44] : memref<3x4xf32, #tpu.memory_space<smem>>
    %c0_45 = arith.constant 0 : index
    %c3_46 = arith.constant 3 : index
    %c0_47 = arith.constant 0 : index
    %c0_48 = arith.constant 0 : index
    %47 = vector.load %arg2[%c0_45, %c3_46, %c0_47, %c0_48] : memref<1x4x8x32xf32, #tpu.memory_space<vmem>>, vector<1x1x8x32xf32>
    %48 = vector.shape_cast %47 : vector<1x1x8x32xf32> to vector<1x8x32xf32>
    %49 = vector.broadcast %46 : f32 to vector<1x8x32xf32>
    %50 = arith.mulf %49, %48 : vector<1x8x32xf32>
    %51 = arith.addf %45, %50 : vector<1x8x32xf32>
    %c1_49 = arith.constant 1 : index
    %52 = memref.load %arg4[%c1_49] : memref<3xf32, #tpu.memory_space<smem>>
    %53 = vector.broadcast %52 : f32 to vector<1x8x32xf32>
    %54 = arith.addf %51, %53 : vector<1x8x32xf32>
    %c0_50 = arith.constant 0 : index
    %c1_51 = arith.constant 1 : index
    %c0_52 = arith.constant 0 : index
    %c0_53 = arith.constant 0 : index
    %55 = vector.load %arg5[%c0_50, %c1_51, %c0_52, %c0_53] : memref<1x3x8x32xf32, #tpu.memory_space<vmem>>, vector<1x1x8x32xf32>
    %56 = vector.shape_cast %55 : vector<1x1x8x32xf32> to vector<1x8x32xf32>
    %57 = vector.shape_cast %54 : vector<1x8x32xf32> to vector<1x1x8x32xf32>
    tpu.vector_store %arg5[%c0_50, %c1_51, %c0_52, %c0_53], %57 {strides = array<i32>} : memref<1x3x8x32xf32, #tpu.memory_space<vmem>>, vector<1x1x8x32xf32>,
    %c2_54 = arith.constant 2 : index
    %c0_55 = arith.constant 0 : index
    %58 = memref.load %arg3[%c2_54, %c0_55] : memref<3x4xf32, #tpu.memory_space<smem>>
    %c0_56 = arith.constant 0 : index
    %c0_57 = arith.constant 0 : index
    %c0_58 = arith.constant 0 : index
    %c0_59 = arith.constant 0 : index
    %59 = vector.load %arg2[%c0_56, %c0_57, %c0_58, %c0_59] : memref<1x4x8x32xf32, #tpu.memory_space<vmem>>, vector<1x1x8x32xf32>
    %60 = vector.shape_cast %59 : vector<1x1x8x32xf32> to vector<1x8x32xf32>
    %61 = vector.broadcast %58 : f32 to vector<1x8x32xf32>
    %62 = arith.mulf %61, %60 : vector<1x8x32xf32>
    %c2_60 = arith.constant 2 : index
    %c1_61 = arith.constant 1 : index
    %63 = memref.load %arg3[%c2_60, %c1_61] : memref<3x4xf32, #tpu.memory_space<smem>>
    %c0_62 = arith.constant 0 : index
    %c1_63 = arith.constant 1 : index
    %c0_64 = arith.constant 0 : index
    %c0_65 = arith.constant 0 : index
    %64 = vector.load %arg2[%c0_62, %c1_63, %c0_64, %c0_65] : memref<1x4x8x32xf32, #tpu.memory_space<vmem>>, vector<1x1x8x32xf32>
    %65 = vector.shape_cast %64 : vector<1x1x8x32xf32> to vector<1x8x32xf32>
    %66 = vector.broadcast %63 : f32 to vector<1x8x32xf32>
    %67 = arith.mulf %66, %65 : vector<1x8x32xf32>
    %68 = arith.addf %62, %67 : vector<1x8x32xf32>
    %c2_66 = arith.constant 2 : index
    %c2_67 = arith.constant 2 : index
    %69 = memref.load %arg3[%c2_66, %c2_67] : memref<3x4xf32, #tpu.memory_space<smem>>
    %c0_68 = arith.constant 0 : index
    %c2_69 = arith.constant 2 : index
    %c0_70 = arith.constant 0 : index
    %c0_71 = arith.constant 0 : index
    %70 = vector.load %arg2[%c0_68, %c2_69, %c0_70, %c0_71] : memref<1x4x8x32xf32, #tpu.memory_space<vmem>>, vector<1x1x8x32xf32>
    %71 = vector.shape_cast %70 : vector<1x1x8x32xf32> to vector<1x8x32xf32>
    %72 = vector.broadcast %69 : f32 to vector<1x8x32xf32>
    %73 = arith.mulf %72, %71 : vector<1x8x32xf32>
    %74 = arith.addf %68, %73 : vector<1x8x32xf32>
    %c2_72 = arith.constant 2 : index
    %c3_73 = arith.constant 3 : index
    %75 = memref.load %arg3[%c2_72, %c3_73] : memref<3x4xf32, #tpu.memory_space<smem>>
    %c0_74 = arith.constant 0 : index
    %c3_75 = arith.constant 3 : index
    %c0_76 = arith.constant 0 : index
    %c0_77 = arith.constant 0 : index
    %76 = vector.load %arg2[%c0_74, %c3_75, %c0_76, %c0_77] : memref<1x4x8x32xf32, #tpu.memory_space<vmem>>, vector<1x1x8x32xf32>
    %77 = vector.shape_cast %76 : vector<1x1x8x32xf32> to vector<1x8x32xf32>
    %78 = vector.broadcast %75 : f32 to vector<1x8x32xf32>
    %79 = arith.mulf %78, %77 : vector<1x8x32xf32>
    %80 = arith.addf %74, %79 : vector<1x8x32xf32>
    %c2_78 = arith.constant 2 : index
    %81 = memref.load %arg4[%c2_78] : memref<3xf32, #tpu.memory_space<smem>>
    %82 = vector.broadcast %81 : f32 to vector<1x8x32xf32>
    %83 = arith.addf %80, %82 : vector<1x8x32xf32>
    %c0_79 = arith.constant 0 : index
    %c2_80 = arith.constant 2 : index
    %c0_81 = arith.constant 0 : index
    %c0_82 = arith.constant 0 : index
    %84 = vector.load %arg5[%c0_79, %c2_80, %c0_81, %c0_82] : memref<1x3x8x32xf32, #tpu.memory_space<vmem>>, vector<1x1x8x32xf32>
    %85 = vector.shape_cast %84 : vector<1x1x8x32xf32> to vector<1x8x32xf32>
    %86 = vector.shape_cast %83 : vector<1x8x32xf32> to vector<1x1x8x32xf32>
    tpu.vector_store %arg5[%c0_79, %c2_80, %c0_81, %c0_82], %86 {strides = array<i32>} : memref<1x3x8x32xf32, #tpu.memory_space<vmem>>, vector<1x1x8x32xf32>,
    return
  }
  func.func @transform_0(%arg0: i32, %arg1: i32) -> (i32, i32, i32, i32) {
    %c0_i32 = arith.constant 0 : i32
    %c0_i32_0 = arith.constant 0 : i32
    %c0_i32_1 = arith.constant 0 : i32
    return %arg0, %c0_i32, %c0_i32_0, %arg1 : i32, i32, i32, i32
  }
  func.func @transform_1(%arg0: i32, %arg1: i32) -> (i32, i32) {
    %c0_i32 = arith.constant 0 : i32
    %c0_i32_0 = arith.constant 0 : i32
    %c0_i32_1 = arith.constant 0 : i32
    return %c0_i32, %c0_i32_0 : i32, i32
  }
  func.func @transform_2(%arg0: i32, %arg1: i32) -> i32 {
    %c0_i32 = arith.constant 0 : i32
    %c0_i32_0 = arith.constant 0 : i32
    return %c0_i32 : i32
  }
  func.func @transform_3(%arg0: i32, %arg1: i32) -> (i32, i32, i32, i32) {
    %c0_i32 = arith.constant 0 : i32
    %c0_i32_0 = arith.constant 0 : i32
    %c0_i32_1 = arith.constant 0 : i32
    return %arg0, %c0_i32, %c0_i32_0, %arg1 : i32, i32, i32, i32
  }
}

</mosaic_0001>

<llo_original>
// kernel: tpu_custom_call.1
$region0: #{tpu_custom_call.1}
  #allocation0 [shape = 'u32[]', space=smem, size = 0x4, offset = 0x4, fixed_abs, tag = 'smem constant byte address 0x4 - core index']
  #allocation1 [shape = 'u32[144,128]{1,0:T(1,128)}', space=vmem, size = 0x12000, scoped, tag = 'internal scratch']
  %s0 = inlined_call_operand.hbm [shape: f32[2,4,8,32], index: 0, kind: input, shape index: {}]
  %s1 = inlined_call_operand.hbm [shape: f32[3,4], index: 1, kind: input, shape index: {}]
  %s2 = inlined_call_operand.vmem [shape: f32[3], index: 2, kind: input, shape index: {}]
  %s3 = inlined_call_operand.hbm [shape: f32[2,3,8,32], index: 3, kind: output, shape index: {}]
  %s4 = sld [smem:[#allocation0]]
  $region57: #{tpu_custom_call.1} parent=0
    _
  %s6 = ssub.s32 1, %s4
  %s7 = scalar_select 0, %s6, %s4
  $region1: #{tpu_custom_call.1} parent=0
    #allocation2 [shape = 'u8[32768]{0}', space=vmem, size = 0x8000, scoped, tag = 'input window, operand 0']
    #allocation3 [shape = 's32[2]{0}', space=sflag, size = 0x8, scoped, tag = 'scoped memory for tpu_custom_call.1']
    #allocation4 [shape = 's32[2]{0}', space=sflag, size = 0x8, scoped, tag = 'scoped memory for tpu_custom_call.1']
    #allocation5 [shape = 's32[2]{0}', space=sflag, size = 0x8, scoped, tag = 'scoped memory for tpu_custom_call.1']
    #allocation6 [shape = 's32[2]{0}', space=sflag, size = 0x8, scoped, tag = 'scoped memory for tpu_custom_call.1']
    #allocation7 [shape = 'u8[2048]{0}', space=smem, size = 0x800, scoped, tag = 'input window, operand 1, single buffered']
    #allocation8 [shape = 'u8[512]{0}', space=smem, size = 0x200, scoped, tag = 'input window, operand 2, single buffered']
    #allocation9 [shape = 'u8[24576]{0}', space=vmem, size = 0x6000, scoped, tag = 'output window, operand 0']
    %8 = vsyncpa [#allocation3], 0
    %s9 = scalar_lea.sflag [#allocation3], 1
    %10 = vsyncpa %s9, 0
    %11 = vsyncpa [#allocation5], 0
    %12 = vsyncpa [#allocation6], 0
    %13 = vsyncpa [#allocation4], 0
    %s14 = scalar_lea.sflag [#allocation4], 1
    %15 = vsyncpa %s14, 0
    loop: start=0, step=1, limit=4
    $region2: #{tpu_custom_call.1} parent=1 // loop_pre_header
      _
    $region3: #{tpu_custom_call.1} parent=1 // loop_header
      %s17 = sphi 0, %s21
      %p18 = scmp.ge.s32.totalorder %s17, 4
      %s24 = sphi 0, %s36
      %s25 = sphi 0, %s32
      %s26 = sphi 0, %s24
      %s27 = sphi 0, %s25
      %s28 = sphi 0, %s26
      %s29 = sphi 0, %s27
      %s41 = sphi 0, %s43
      %s44 = sphi 0, %s41
      %s45 = sphi 0, %s44
      %s61 = sphi 0, %s45
      %s65 = sphi 0, %s65
      %s67 = sphi 0, %s65
      %s68 = sphi 0, %s67
      %s82 = sphi 0, %s68
      %s86 = sphi 0, %s86
      %s88 = sphi 0, %s86
      %s89 = sphi 0, %s88
      %s103 = sphi 0, %s89
      %s111 = sphi 0, %s113
      %s114 = sphi 0, %s111
      %s115 = sphi 0, %s114
      %s131 = sphi 0, %s115
    $region4: #{tpu_custom_call.1} parent=1 // loop_header_branch
      %20 = sbr.rel (%p18) target = $region8
    $region5: #{tpu_custom_call.1} parent=1 // loop_body
      %s22 = ssub.s32 %s17, 1
      %s23 = ssub.s32 %s17, 2
      %s30 = sadd.s32 1, %s25
      %p31 = scmp.ge.s32.totalorder %s30, 1
      %s32 = scalar_select %p31, 0, %s30
      %s33 = sadd.s32 1, %s24
      %s34 = scalar_select %p31, %s33, %s24
      %p35 = scmp.ge.s32.totalorder %s34, 2
      %s36 = scalar_select %p35, 0, %s34
      %s37 = ssub.s32 %s24, %s36
      %s38 = ssub.s32 %s25, %s32
      %s39 = sor.u32 %s37, %s38
      %p40 = scmp.eq.s32.totalorder %s39, 0
      %s42 = sadd.s32 %s41, 1
      %s43 = scalar_select %p40, %s41, %s42
      %p46 = pneg %p40
      %p47 = scmp.eq.s32.totalorder %s17, 1
      %p48 = por %p46, %p47
      %p49 = scmp.ne.s32.totalorder %s41, %s44
      %p50 = scmp.eq.s32.totalorder %s17, 0
      %p51 = por %p49, %p50
      %p52 = scmp.ne.s32.totalorder %s41, %s44
      %p53 = scmp.eq.s32.totalorder %s22, 1
      %p54 = por %p52, %p53
      %p55 = scmp.ne.s32.totalorder %s44, %s45
      %p56 = scmp.eq.s32.totalorder %s22, 0
      %p57 = por %p55, %p56
      %p58 = scmp.ne.s32.totalorder %s44, %s45
      %p59 = scmp.eq.s32.totalorder %s23, 1
      %p60 = por %p58, %p59
      %p62 = scmp.ne.s32.totalorder %s45, %s61
      %p63 = scmp.eq.s32.totalorder %s23, 0
      %p64 = por %p62, %p63
      %s66 = sadd.s32 %s65, 1
      %p69 = scmp.eq.s32.totalorder %s17, 1
      %p70 = scmp.ne.s32.totalorder %s65, %s67
      %p71 = scmp.eq.s32.totalorder %s17, 0
      %p72 = por %p70, %p71
      %p73 = scmp.ne.s32.totalorder %s65, %s67
      %p74 = scmp.eq.s32.totalorder %s22, 1
      %p75 = por %p73, %p74
      %p76 = scmp.ne.s32.totalorder %s67, %s68
      %p77 = scmp.eq.s32.totalorder %s22, 0
      %p78 = por %p76, %p77
      %p79 = scmp.ne.s32.totalorder %s67, %s68
      %p80 = scmp.eq.s32.totalorder %s23, 1
      %p81 = por %p79, %p80
      %p83 = scmp.ne.s32.totalorder %s68, %s82
      %p84 = scmp.eq.s32.totalorder %s23, 0
      %p85 = por %p83, %p84
      %s87 = sadd.s32 %s86, 1
      %p90 = scmp.eq.s32.totalorder %s17, 1
      %p91 = scmp.ne.s32.totalorder %s86, %s88
      %p92 = scmp.eq.s32.totalorder %s17, 0
      %p93 = por %p91, %p92
      %p94 = scmp.ne.s32.totalorder %s86, %s88
      %p95 = scmp.eq.s32.totalorder %s22, 1
      %p96 = por %p94, %p95
      %p97 = scmp.ne.s32.totalorder %s88, %s89
      %p98 = scmp.eq.s32.totalorder %s22, 0
      %p99 = por %p97, %p98
      %p100 = scmp.ne.s32.totalorder %s88, %s89
      %p101 = scmp.eq.s32.totalorder %s23, 1
      %p102 = por %p100, %p101
      %p104 = scmp.ne.s32.totalorder %s89, %s103
      %p105 = scmp.eq.s32.totalorder %s23, 0
      %p106 = por %p104, %p105
      %s107 = ssub.s32 %s24, %s36
      %s108 = ssub.s32 %s25, %s32
      %s109 = sor.u32 %s107, %s108
      %p110 = scmp.eq.s32.totalorder %s109, 0
      %s112 = sadd.s32 %s111, 1
      %s113 = scalar_select %p110, %s111, %s112
      %p116 = pneg %p110
      %p117 = scmp.eq.s32.totalorder %s17, 1
      %p118 = por %p116, %p117
      %p119 = scmp.ne.s32.totalorder %s111, %s114
      %p120 = scmp.eq.s32.totalorder %s17, 0
      %p121 = por %p119, %p120
      %p122 = scmp.ne.s32.totalorder %s111, %s114
      %p123 = scmp.eq.s32.totalorder %s22, 1
      %p124 = por %p122, %p123
      %p125 = scmp.ne.s32.totalorder %s114, %s115
      %p126 = scmp.eq.s32.totalorder %s22, 0
      %p127 = por %p125, %p126
      %p128 = scmp.ne.s32.totalorder %s114, %s115
      %p129 = scmp.eq.s32.totalorder %s23, 1
      %p130 = por %p128, %p129
      %p132 = scmp.ne.s32.totalorder %s115, %s131
      %p133 = scmp.eq.s32.totalorder %s23, 0
      %p134 = por %p132, %p133
      %p135 = scmp.le.s32.totalorder 1, %s17
      %p136 = scmp.lt.s32.totalorder %s17, 3
      %p137 = pnand %p135, %p136
      %p138 = pneg %p137
      // Predicated region
      $region9: #{tpu_custom_call.1} parent=5 // pred_check
        _
      $region10: #{tpu_custom_call.1} parent=5 // pred_check_branch
        %140 = sbr.rel (%p137) target = $region12
      $region11: #{tpu_custom_call.1} parent=5 // pred_region
        %s141 = ssub.s32 %s17, 1
        // Predicated region
        $region13: #{tpu_custom_call.1} parent=11 // pred_check
          %p142 = pneg %p78
        $region14: #{tpu_custom_call.1} parent=11 // pred_check_branch
          %144 = sbr.rel (%p142) target = $region16
        $region15: #{tpu_custom_call.1} parent=11 // pred_region
          %s146 = ssub.s32 64, 64
          %147 = vsyncadd [#allocation5], %s146
          %150 = dma.hbm_to_smem %s1, 64, [#allocation7], [#allocation5]
        $region16: #{tpu_custom_call.1} parent=11 // pred_fallthru
          _
        // Predicated region
        $region17: #{tpu_custom_call.1} parent=11 // pred_check
          %p151 = pneg %p99
        $region18: #{tpu_custom_call.1} parent=11 // pred_check_branch
          %153 = sbr.rel (%p151) target = $region20
        $region19: #{tpu_custom_call.1} parent=11 // pred_region
          %s155 = ssub.s32 16, 16
          %156 = vsyncadd [#allocation6], %s155
          %s158 = sshll.u32 %s2, 4
          %s159 = int_to_ptr.vmem [resolvable:$true] %s158
          %161 = dma.vmem_to_smem %s159, 16, [#allocation8], [#allocation6]
        $region20: #{tpu_custom_call.1} parent=11 // pred_fallthru
          _
      $region12: #{tpu_custom_call.1} parent=5 // pred_fallthru
        _
      %p162 = scmp.lt.s32.totalorder %s17, 2
      // Predicated region
      $region21: #{tpu_custom_call.1} parent=5 // pred_check
        %p163 = pneg %p162
      $region22: #{tpu_custom_call.1} parent=5 // pred_check_branch
        %165 = sbr.rel (%p163) target = $region24
      $region23: #{tpu_custom_call.1} parent=5 // pred_region
        // Predicated region
        $region25: #{tpu_custom_call.1} parent=23 // pred_check
          %p166 = pneg %p51
        $region26: #{tpu_custom_call.1} parent=23 // pred_check_branch
          %168 = sbr.rel (%p166) target = $region28
        $region27: #{tpu_custom_call.1} parent=23 // pred_region
          %s169 = sand.u32 %s41, 1
          %s170 = scalar_lea.sflag [#allocation3], %s169
          %s171 = sand.u32 %s41, 1
          %s172 = smul.addr %s171, 32
          %s173 = scalar_lea.vmem [#allocation2], %s172
          %s175 = ssub.s32 512, 512
          %176 = vsyncadd %s170, %s175
          %s177 = smul.addr %s24, 4
          %s178 = sadd.s32 %s25, %s177
          %s179 = smul.addr %s178, 128
          %s180 = scalar_lea.hbm %s0, %s179
          %s181 = sshll.u32 %s173, 4
          %s182 = int_to_ptr.vmem [resolvable:$true] %s181
          %187 = dma.hbm_to_vmem [thread:$0]  %s180, 512, %s182, %s170, 128, 128, 8
        $region28: #{tpu_custom_call.1} parent=23 // pred_fallthru
          _
      $region24: #{tpu_custom_call.1} parent=5 // pred_fallthru
        _
      %p188 = scmp.le.s32.totalorder 1, %s17
      %p189 = scmp.lt.s32.totalorder %s17, 3
      %p190 = pnand %p188, %p189
      %p191 = pneg %p190
      // Predicated region
      $region29: #{tpu_custom_call.1} parent=5 // pred_check
        _
      $region30: #{tpu_custom_call.1} parent=5 // pred_check_branch
        %193 = sbr.rel (%p190) target = $region32
      $region31: #{tpu_custom_call.1} parent=5 // pred_region
        %s194 = ssub.s32 %s17, 1
        %s195 = sand.u32 %s44, 1
        %s196 = scalar_lea.sflag [#allocation3], %s195
        %s197 = sand.u32 %s44, 1
        %s198 = smul.addr %s197, 32
        %s199 = scalar_lea.vmem [#allocation2], %s198
        // Predicated region
        $region33: #{tpu_custom_call.1} parent=31 // pred_check
          %p200 = pneg %p57
        $region34: #{tpu_custom_call.1} parent=31 // pred_check_branch
          %202 = sbr.rel (%p200) target = $region36
        $region35: #{tpu_custom_call.1} parent=31 // pred_region
          %203 = dma.done %s196, 512
        $region36: #{tpu_custom_call.1} parent=31 // pred_fallthru
          _
        // Predicated region
        $region37: #{tpu_custom_call.1} parent=31 // pred_check
          %p204 = pneg %p78
        $region38: #{tpu_custom_call.1} parent=31 // pred_check_branch
          %206 = sbr.rel (%p204) target = $region40
        $region39: #{tpu_custom_call.1} parent=31 // pred_region
          %207 = dma.done [#allocation5], 64
        $region40: #{tpu_custom_call.1} parent=31 // pred_fallthru
          _
        // Predicated region
        $region41: #{tpu_custom_call.1} parent=31 // pred_check
          %p208 = pneg %p99
        $region42: #{tpu_custom_call.1} parent=31 // pred_check_branch
          %210 = sbr.rel (%p208) target = $region44
        $region43: #{tpu_custom_call.1} parent=31 // pred_region
          %211 = dma.done [#allocation6], 16
        $region44: #{tpu_custom_call.1} parent=31 // pred_fallthru
          _
        %212 = sfence
        %s213 = sand.u32 %s44, 1
        %s214 = scalar_lea.sflag [#allocation3], %s213
        %s215 = sand.u32 %s44, 1
        %s216 = smul.addr %s215, 32
        %s217 = scalar_lea.vmem [#allocation2], %s216
        %p218 = pneg %p57
        %p219 = pneg %p54
        %p220 = pneg %p78
        %p221 = pneg %p75
        %p222 = pneg %p99
        %p223 = pneg %p96
        %p224 = pneg %p127
        %p225 = pneg %p124
        %s226 = sand.u32 %s114, 1
        %s227 = scalar_lea.sflag [#allocation4], %s226
        %s228 = sand.u32 %s114, 1
        %s229 = smul.addr %s228, 24
        %s230 = scalar_lea.vmem [#allocation9], %s229
        %s231 = sld [smem:[#allocation7]]
        %v232 = vld [vmem:[%s199] sm:$0xff]
        %v233 = vstv %s231
        %v234 = vmul.f32 %v233, %v232
        %s235 = sld [smem:[#allocation7 + $0x1]]
        %s236 = scalar_lea.vmem %s199, 8 [#allocation2]
        %v237 = vld [vmem:[%s236] sm:$0xff]
        %v238 = vstv %s235
        %v239 = vmul.f32 %v238, %v237
        %v240 = vadd.f32 %v234, %v239
        %s241 = sld [smem:[#allocation7 + $0x2]]
        %s242 = scalar_lea.vmem %s199, 16 [#allocation2]
        %v243 = vld [vmem:[%s242] sm:$0xff]
        %v244 = vstv %s241
        %v245 = vmul.f32 %v244, %v243
        %v246 = vadd.f32 %v240, %v245
        %s247 = sld [smem:[#allocation7 + $0x3]]
        %s248 = scalar_lea.vmem %s199, 24 [#allocation2]
        %v249 = vld [vmem:[%s248] sm:$0xff]
        %v250 = vstv %s247
        %v251 = vmul.f32 %v250, %v249
        %v252 = vadd.f32 %v246, %v251
        %s253 = sld [smem:[#allocation8]]
        %v254 = vstv %s253
        %v255 = vadd.f32 %v252, %v254
        %vm256 = vcmask 261120
        %257 = vst.msk [vmem:[%s230] sm:$0xff] %vm256, %v255
        %s258 = sld [smem:[#allocation7 + $0x80]]
        %v259 = vld [vmem:[%s199] sm:$0xff]
        %v260 = vstv %s258
        %v261 = vmul.f32 %v260, %v259
        %s262 = sld [smem:[#allocation7 + $0x81]]
        %v263 = vld [vmem:[%s236] sm:$0xff]
        %v264 = vstv %s262
        %v265 = vmul.f32 %v264, %v263
        %v266 = vadd.f32 %v261, %v265
        %s267 = sld [smem:[#allocation7 + $0x82]]
        %v268 = vld [vmem:[%s242] sm:$0xff]
        %v269 = vstv %s267
        %v270 = vmul.f32 %v269, %v268
        %v271 = vadd.f32 %v266, %v270
        %s272 = sld [smem:[#allocation7 + $0x83]]
        %v273 = vld [vmem:[%s248] sm:$0xff]
        %v274 = vstv %s272
        %v275 = vmul.f32 %v274, %v273
        %v276 = vadd.f32 %v271, %v275
        %s277 = sld [smem:[#allocation8 + $0x1]]
        %v278 = vstv %s277
        %v279 = vadd.f32 %v276, %v278
        %s280 = scalar_lea.vmem %s230, 8 [#allocation9]
        %281 = vst.msk [vmem:[%s280] sm:$0xff] %vm256, %v279
        %s282 = sld [smem:[#allocation7 + $0x100]]
        %v283 = vld [vmem:[%s199] sm:$0xff]
        %v284 = vstv %s282
        %v285 = vmul.f32 %v284, %v283
        %s286 = sld [smem:[#allocation7 + $0x101]]
        %v287 = vld [vmem:[%s236] sm:$0xff]
        %v288 = vstv %s286
        %v289 = vmul.f32 %v288, %v287
        %v290 = vadd.f32 %v285, %v289
        %s291 = sld [smem:[#allocation7 + $0x102]]
        %v292 = vld [vmem:[%s242] sm:$0xff]
        %v293 = vstv %s291
        %v294 = vmul.f32 %v293, %v292
        %v295 = vadd.f32 %v290, %v294
        %s296 = sld [smem:[#allocation7 + $0x103]]
        %v297 = vld [vmem:[%s248] sm:$0xff]
        %v298 = vstv %s296
        %v299 = vmul.f32 %v298, %v297
        %v300 = vadd.f32 %v295, %v299
        %s301 = sld [smem:[#allocation8 + $0x2]]
        %v302 = vstv %s301
        %v303 = vadd.f32 %v300, %v302
        %s304 = scalar_lea.vmem %s230, 16 [#allocation9]
        %305 = vst.msk [vmem:[%s304] sm:$0xff] %vm256, %v303
        %s306 = sand.u32 %s114, 1
        %s307 = scalar_lea.sflag [#allocation4], %s306
        %s308 = sand.u32 %s114, 1
        %s309 = smul.addr %s308, 24
        %s310 = scalar_lea.vmem [#allocation9], %s309
        // Predicated region
        $region45: #{tpu_custom_call.1} parent=31 // pred_check
          %p311 = pneg %p124
        $region46: #{tpu_custom_call.1} parent=31 // pred_check_branch
          %313 = sbr.rel (%p311) target = $region48
        $region47: #{tpu_custom_call.1} parent=31 // pred_region
          %s315 = ssub.s32 384, 384
          %316 = vsyncadd %s307, %s315
          %s317 = smul.addr %s26, 3
          %s318 = sadd.s32 %s27, %s317
          %s319 = smul.addr %s318, 128
          %s320 = scalar_lea.hbm %s3, %s319
          %s321 = sshll.u32 %s310, 4
          %s322 = int_to_ptr.vmem [resolvable:$true] %s321
          %327 = dma.vmem_to_hbm [thread:$0]  %s322, 384, %s320, %s307, 128, 128, 8
        $region48: #{tpu_custom_call.1} parent=31 // pred_fallthru
          _
      $region32: #{tpu_custom_call.1} parent=5 // pred_fallthru
        _
      %p328 = scmp.le.s32.totalorder 2, %s17
      // Predicated region
      $region49: #{tpu_custom_call.1} parent=5 // pred_check
        %p329 = pneg %p328
      $region50: #{tpu_custom_call.1} parent=5 // pred_check_branch
        %331 = sbr.rel (%p329) target = $region52
      $region51: #{tpu_custom_call.1} parent=5 // pred_region
        %s332 = ssub.s32 %s17, 2
        // Predicated region
        $region53: #{tpu_custom_call.1} parent=51 // pred_check
          %p333 = pneg %p130
        $region54: #{tpu_custom_call.1} parent=51 // pred_check_branch
          %335 = sbr.rel (%p333) target = $region56
        $region55: #{tpu_custom_call.1} parent=51 // pred_region
          %s336 = sand.u32 %s115, 1
          %s337 = scalar_lea.sflag [#allocation4], %s336
          %s338 = sand.u32 %s115, 1
          %s339 = smul.addr %s338, 24
          %s340 = scalar_lea.vmem [#allocation9], %s339
          %341 = dma.done %s337, 384
        $region56: #{tpu_custom_call.1} parent=51 // pred_fallthru
          _
      $region52: #{tpu_custom_call.1} parent=5 // pred_fallthru
        _
    $region6: #{tpu_custom_call.1} parent=1 // loop_footer
      %s21 = sadd.s32 1, %s17
    $region7: #{tpu_custom_call.1} parent=1 // loop_footer_branch
      %16 = sbr.rel target = $region3
    $region8: #{tpu_custom_call.1} parent=1 // loop_exit
      _
    %342 = vsyncpa [#allocation3], 1
    %s343 = scalar_lea.sflag [#allocation3], 1
    %344 = vsyncpa %s343, 1
    %345 = vsyncpa [#allocation4], 1
    %s346 = scalar_lea.sflag [#allocation4], 1
    %347 = vsyncpa %s346, 1
    %348 = vsyncpa [#allocation5], 1
    %s349 = scalar_lea.sflag [#allocation5], 1
    %350 = vsyncpa %s349, 1
    %351 = vsyncpa [#allocation6], 1
    %s352 = scalar_lea.sflag [#allocation6], 1
    %353 = vsyncpa %s352, 1

</llo_original>
